<compile_context>
chip_gen: v7x
topology: tpu7x:2x2x1
jax: 0.10.0
libtpu: 0.0.40
codegen_flags: <defaults>
</compile_context>

<pallas_src>
import functools

import jax
import jax.numpy as jnp
from jax import lax
from jax.experimental import pallas as pl
from jax.experimental.pallas import tpu as pltpu


_UNROLL_N = 32  # scan-all-indices (fully unrolled) path only for small N


# --------------------------------------------------------------------------- #
# Kernels
# --------------------------------------------------------------------------- #
def _kernel_scan_all(idx_ref, t_ref, v_ref, o_ref, *,
                     num_idx, rows_per_tile, num_rows, accumulate):
    """Small-N path: every tile scans all indices (fully unrolled)."""
    two = jnp.asarray(2, dtype=o_ref.dtype)
    o_ref[...] = t_ref[...] * two                      # fused copy + doubling

    tile_start = pl.program_id(0) * rows_per_tile

    def body(i, carry):
        r = idx_ref[i]                                 # scalar index (SMEM)
        in_tile = jnp.logical_and(r >= tile_start, r < tile_start + rows_per_tile)
        in_bounds = jnp.logical_and(in_tile, r < num_rows)   # OOB-write guard

        @pl.when(in_bounds)
        def _():
            local = r - tile_start
            row2 = v_ref[i, :].astype(o_ref.dtype) * two
            if accumulate:
                # (t + v) * 2 == 2*t + 2*v
                o_ref[local, :] = o_ref[local, :] + row2
            else:
                o_ref[local, :] = row2
        return carry

    # num_idx is small and Python-static: full unroll for scheduler visibility.
    lax.fori_loop(0, num_idx, body, 0, unroll=True)


def _kernel_sorted(idx_ref, starts_ref, t_ref, v_ref, o_ref, *,
                   rows_per_tile, accumulate):
    """Large-N path: indices pre-sorted; loop only over this tile's slice."""
    two = jnp.asarray(2, dtype=o_ref.dtype)
    o_ref[...] = t_ref[...] * two

    b = pl.program_id(0)
    tile_start = b * rows_per_tile
    lo = starts_ref[b]
    hi = starts_ref[b + 1]

    def body(i, carry):
        local = idx_ref[i] - tile_start                # guaranteed in [0, TR)
        row2 = v_ref[i, :].astype(o_ref.dtype) * two
        if accumulate:
            o_ref[local, :] = o_ref[local, :] + row2
        else:
            o_ref[local, :] = row2
        return carry

    # Rolled loop with dynamic trip count: scatter is not on the critical path
    # of this HBM-bound kernel, so unrolling would only bloat bundle count.
    lax.fori_loop(lo, hi, body, 0)


# --------------------------------------------------------------------------- #
# Wrapper
# --------------------------------------------------------------------------- #
def _sublane_multiple(itemsize):
    # Packed-sublane tiling: f32 -> 8, bf16 -> 16, int8/fp8 -> 32 rows.
    return {1: 32, 2: 16, 4: 8}.get(int(itemsize), 8)


def _vmem_capacity_bytes():
    try:
        info = pltpu.get_tpu_info()
        return int(getattr(info, "vmem_capacity_bytes", 64 << 20))
    except Exception:
        return 64 << 20        # conservative default (v7x per-TC VMEM)


def _choose_row_tile(num_rows, row_bytes, sublane, val_bytes, vmem_cap):
    """Byte-budget-driven row tile with a generation-aware VMEM cap."""
    tile_target = 8 << 20                               # ~8 MiB tile sweet spot
    budget = min((vmem_cap * 3) // 4, 96 << 20)         # ~48 MiB v7x, 96 MiB v5e/v6e
    avail = budget - val_bytes - (2 << 20)              # headroom (SMEM, scratch)
    tr_vmem = max(avail // (4 * row_bytes), 1)          # 2x in + 2x out buffers
    tr = min(tile_target // row_bytes, tr_vmem)
    tr = max(tr, sublane)
    if tr >= num_rows:
        # Whole tensor fits in one tile: split into >=2 grid steps (when big
        # enough) so the "parallel" axis shards across v7x's 2 TensorCores.
        if num_rows > sublane:
            half = (num_rows + 1) // 2
            tr = ((half + sublane - 1) // sublane) * sublane
            if tr >= num_rows:
                tr = num_rows
        else:
            tr = num_rows
    else:
        tr = max(sublane, (tr // sublane) * sublane)
    return int(tr)


def index_put_double(tensor, indices, val, accumulate=False):
    """Pallas equivalent of IndexPutModule.forward.

    tensor : (R, C) array
    indices: (N,) int array of row indices (first-dim index_put; negatives ok)
    val    : (N, C) rows to put / accumulate
    returns 2 * tensor.at[indices].set/add(val)
    """
    R, C = tensor.shape
    N = int(indices.shape[0])

    if N == 0:
        return tensor * jnp.asarray(2, dtype=tensor.dtype)

    # torch index_put_ supports negative indices: normalize to [0, R).
    indices = indices.astype(jnp.int32)
    indices = jnp.where(indices < 0, indices + R, indices)

    # Lane-dense stores: pad C to a multiple of 128 (unmasked vst).
    C_pad = ((C + 127) // 128) * 128
    if C_pad != C:
        tensor = jnp.pad(tensor, ((0, 0), (0, C_pad - C)))
        val = jnp.pad(val, ((0, 0), (0, C_pad - C)))

    itemsize = jnp.dtype(tensor.dtype).itemsize
    val_itemsize = jnp.dtype(val.dtype).itemsize
    sublane = _sublane_multiple(itemsize)
    row_bytes = C_pad * itemsize
    vmem_cap = _vmem_capacity_bytes()

    # val's index map is constant across the grid -> a single buffer suffices.
    def val_map(b, *prefetch):
        return (0, 0)

    val_buffers = 1
    try:
        val_spec = pl.BlockSpec((N, C_pad), val_map, pipeline_mode=pl.Buffered(1))
    except TypeError:                                  # older BlockSpec signature
        val_spec = pl.BlockSpec((N, C_pad), val_map)
        val_buffers = 2
    val_bytes = val_buffers * N * C_pad * val_itemsize

    TR = _choose_row_tile(R, row_bytes, sublane, val_bytes, vmem_cap)
    grid = (pl.cdiv(R, TR),)
    num_tiles = int(grid[0])

    tile_spec = pl.BlockSpec((TR, C_pad), lambda b, *prefetch: (b, 0))

    # Explicit VMEM limit from the actual per-step footprint (+ headroom).
    per_step_bytes = 4 * TR * row_bytes + val_bytes
    vmem_limit = int(min(max(per_step_bytes + (4 << 20), 32 << 20),
                         vmem_cap - (2 << 20)))

    compiler_params = pltpu.CompilerParams(
        dimension_semantics=("parallel",),             # shard tiles on v7x 2 TCs
        vmem_limit_bytes=vmem_limit,
    )

    cost = pl.CostEstimate(
        flops=int(R * C_pad + N * C_pad),
        transcendentals=0,
        bytes_accessed=int(2 * R * C_pad * itemsize + N * C_pad * val_itemsize),
    )

    if N <= _UNROLL_N:
        # Small N: every tile scans all indices (cheap; hidden under HBM slack).
        kernel = functools.partial(
            _kernel_scan_all, num_idx=N, rows_per_tile=TR, num_rows=R,
            accumulate=accumulate)
        out = pl.pallas_call(
            kernel,
            out_shape=jax.ShapeDtypeStruct((R, C_pad), tensor.dtype),
            grid_spec=pltpu.PrefetchScalarGridSpec(
                num_scalar_prefetch=1,                 # indices -> SMEM
                grid=grid,
                in_specs=[tile_spec, val_spec],
                out_specs=tile_spec,
            ),
            compiler_params=compiler_params,
            input_output_aliases={1: 0},               # tensor aliases the output
            cost_estimate=cost,
        )(indices, tensor, val)
    else:
        # Large N: sort indices and prefetch per-tile [start, end) offsets so
        # scalar scatter work is O(N) total instead of O(N * num_tiles).
        order = jnp.argsort(indices)                   # stable sort
        idx_sorted = indices[order]
        val_sorted = val[order]
        boundaries = jnp.arange(num_tiles + 1, dtype=jnp.int32) * TR
        starts = jnp.searchsorted(idx_sorted, boundaries, side="left")
        starts = starts.astype(jnp.int32)

        kernel = functools.partial(
            _kernel_sorted, rows_per_tile=TR, accumulate=accumulate)
        out = pl.pallas_call(
            kernel,
            out_shape=jax.ShapeDtypeStruct((R, C_pad), tensor.dtype),
            grid_spec=pltpu.PrefetchScalarGridSpec(
                num_scalar_prefetch=2,                 # sorted indices + starts
                grid=grid,
                in_specs=[tile_spec, val_spec],
                out_specs=tile_spec,
            ),
            compiler_params=compiler_params,
            input_output_aliases={2: 0},               # tensor aliases the output
            cost_estimate=cost,
        )(idx_sorted, starts, tensor, val_sorted)

    if C_pad != C:
        out = out[:, :C]
    return out


# --------------------------------------------------------------------------- #
# Self-test
# --------------------------------------------------------------------------- #
if __name__ == "__main__":
    key = jax.random.PRNGKey(0)
    k1, k2, k3, k4 = jax.random.split(key, 4)

    # --- Small-N path (scan-all, unrolled); includes a negative index. -------
    R, C, N = 16, 128, 3
    tensor = jax.random.normal(k1, (R, C), dtype=jnp.float32)
    val = jax.random.normal(k2, (N, C), dtype=jnp.float32)
    indices = jnp.array([1, -4, 3], dtype=jnp.int32)      # -4 wraps to row 12

    out_set = jax.block_until_ready(
        index_put_double(tensor, indices, val, accumulate=False))
    ref_set = (tensor.at[indices].set(val)) * 2.0
    assert jnp.allclose(out_set, ref_set, atol=1e-5, rtol=1e-5)

    out_acc = jax.block_until_ready(
        index_put_double(tensor, indices, val, accumulate=True))
    ref_acc = (tensor.at[indices].add(val)) * 2.0
    assert jnp.allclose(out_acc, ref_acc, atol=1e-5, rtol=1e-5)

    # --- Large-N path (sorted indices + per-tile offsets). -------------------
    R2, C2, N2 = 512, 256, 48
    tensor2 = jax.random.normal(k3, (R2, C2), dtype=jnp.float32)
    val2 = jax.random.normal(k4, (N2, C2), dtype=jnp.float32)
    perm = jax.random.permutation(jax.random.PRNGKey(7), R2)[:N2].astype(jnp.int32)

    out2 = jax.block_until_ready(
        index_put_double(tensor2, perm, val2, accumulate=False))
    ref2 = (tensor2.at[perm].set(val2)) * 2.0
    assert jnp.allclose(out2, ref2, atol=1e-5, rtol=1e-5)

    # accumulate=True with duplicate indices (order-independent sum).
    dup_idx = jnp.concatenate([perm[:40], perm[:8]])
    out3 = jax.block_until_ready(
        index_put_double(tensor2, dup_idx, val2, accumulate=True))
    ref3 = (tensor2.at[dup_idx].add(val2)) * 2.0
    assert jnp.allclose(out3, ref3, atol=1e-5, rtol=1e-5)

    print("KERNEL_OK")
</pallas_src>

<mosaic_0001>
module attributes {stable_mosaic.version = 11 : i64} {
  func.func @_kernel_scan_all(%arg0: i32, %arg1: memref<3xi32, #tpu.memory_space<smem>>, %arg2: memref<8x128xf32, #tpu.memory_space<vmem>>, %arg3: memref<3x128xf32, #tpu.memory_space<vmem>>, %arg4: memref<8x128xf32, #tpu.memory_space<vmem>>) attributes {dimension_semantics = [#tpu.dimension_semantics<parallel>], iteration_bounds = array<i64: 2>, scalar_prefetch = 1 : i64, scratch_operands = 0 : i64, tpu.core_type = #tpu.core_type<tc>, window_params = [{transform_indices = @transform_0, window_bounds = array<i64: 8, 128>}, {pipeline_mode = #tpu.pipeline_mode<synchronous>, transform_indices = @transform_1, window_bounds = array<i64: 3, 128>}, {transform_indices = @transform_2, window_bounds = array<i64: 8, 128>}]} {
    %c0 = arith.constant 0 : index
    %c0_0 = arith.constant 0 : index
    %0 = vector.load %arg2[%c0, %c0_0] : memref<8x128xf32, #tpu.memory_space<vmem>>, vector<8x128xf32>
    %cst = arith.constant 2.000000e+00 : f32
    %1 = vector.broadcast %cst : f32 to vector<8x128xf32>
    %2 = arith.mulf %0, %1 : vector<8x128xf32>
    %c0_1 = arith.constant 0 : index
    %c0_2 = arith.constant 0 : index
    %3 = vector.load %arg4[%c0_1, %c0_2] : memref<8x128xf32, #tpu.memory_space<vmem>>, vector<8x128xf32>
    tpu.vector_store %arg4[%c0_1, %c0_2], %2 {strides = array<i32>} : memref<8x128xf32, #tpu.memory_space<vmem>>, vector<8x128xf32>,
    %c8_i32 = arith.constant 8 : i32
    %4 = arith.muli %arg0, %c8_i32 : i32
    %cst_3 = arith.constant 2.000000e+00 : f32
    %c0_i32 = arith.constant 0 : i32
    %5 = arith.index_cast %c0_i32 : i32 to index
    %6 = memref.load %arg1[%5] : memref<3xi32, #tpu.memory_space<smem>>
    %7 = arith.cmpi sge, %6, %4 : i32
    %c8_i32_4 = arith.constant 8 : i32
    %8 = arith.addi %4, %c8_i32_4 : i32
    %9 = arith.cmpi slt, %6, %8 : i32
    %10 = arith.andi %7, %9 : i1
    %c16_i32 = arith.constant 16 : i32
    %11 = arith.cmpi slt, %6, %c16_i32 : i32
    %12 = arith.andi %10, %11 : i1
    %13 = arith.extui %12 : i1 to i32
    %c0_i32_5 = arith.constant 0 : i32
    %14 = arith.cmpi ne, %13, %c0_i32_5 : i32
    scf.if %14 {
      %35 = arith.subi %6, %4 : i32
      %36 = arith.index_cast %c0_i32 : i32 to index
      %c0_12 = arith.constant 0 : index
      %37 = vector.load %arg3[%36, %c0_12] : memref<3x128xf32, #tpu.memory_space<vmem>>, vector<1x128xf32>
      %38 = vector.shape_cast %37 : vector<1x128xf32> to vector<128xf32>
      %39 = vector.broadcast %cst_3 : f32 to vector<128xf32>
      %40 = arith.mulf %38, %39 : vector<128xf32>
      %41 = arith.index_cast %35 : i32 to index
      %c0_13 = arith.constant 0 : index
      %42 = vector.load %arg4[%41, %c0_13] : memref<8x128xf32, #tpu.memory_space<vmem>>, vector<1x128xf32>
      %43 = vector.shape_cast %42 : vector<1x128xf32> to vector<128xf32>
      %44 = vector.shape_cast %40 : vector<128xf32> to vector<1x128xf32>
      tpu.vector_store %arg4[%41, %c0_13], %44 {strides = array<i32>} : memref<8x128xf32, #tpu.memory_space<vmem>>, vector<1x128xf32>,
    } else {
    }
    %c1_i32 = arith.constant 1 : i32
    %15 = arith.index_cast %c1_i32 : i32 to index
    %16 = memref.load %arg1[%15] : memref<3xi32, #tpu.memory_space<smem>>
    %17 = arith.cmpi sge, %16, %4 : i32
    %c8_i32_6 = arith.constant 8 : i32
    %18 = arith.addi %4, %c8_i32_6 : i32
    %19 = arith.cmpi slt, %16, %18 : i32
    %20 = arith.andi %17, %19 : i1
    %c16_i32_7 = arith.constant 16 : i32
    %21 = arith.cmpi slt, %16, %c16_i32_7 : i32
    %22 = arith.andi %20, %21 : i1
    %23 = arith.extui %22 : i1 to i32
    %c0_i32_8 = arith.constant 0 : i32
    %24 = arith.cmpi ne, %23, %c0_i32_8 : i32
    scf.if %24 {
      %35 = arith.subi %16, %4 : i32
      %36 = arith.index_cast %c1_i32 : i32 to index
      %c0_12 = arith.constant 0 : index
      %37 = vector.load %arg3[%36, %c0_12] : memref<3x128xf32, #tpu.memory_space<vmem>>, vector<1x128xf32>
      %38 = vector.shape_cast %37 : vector<1x128xf32> to vector<128xf32>
      %39 = vector.broadcast %cst_3 : f32 to vector<128xf32>
      %40 = arith.mulf %38, %39 : vector<128xf32>
      %41 = arith.index_cast %35 : i32 to index
      %c0_13 = arith.constant 0 : index
      %42 = vector.load %arg4[%41, %c0_13] : memref<8x128xf32, #tpu.memory_space<vmem>>, vector<1x128xf32>
      %43 = vector.shape_cast %42 : vector<1x128xf32> to vector<128xf32>
      %44 = vector.shape_cast %40 : vector<128xf32> to vector<1x128xf32>
      tpu.vector_store %arg4[%41, %c0_13], %44 {strides = array<i32>} : memref<8x128xf32, #tpu.memory_space<vmem>>, vector<1x128xf32>,
    } else {
    }
    %c2_i32 = arith.constant 2 : i32
    %25 = arith.index_cast %c2_i32 : i32 to index
    %26 = memref.load %arg1[%25] : memref<3xi32, #tpu.memory_space<smem>>
    %27 = arith.cmpi sge, %26, %4 : i32
    %c8_i32_9 = arith.constant 8 : i32
    %28 = arith.addi %4, %c8_i32_9 : i32
    %29 = arith.cmpi slt, %26, %28 : i32
    %30 = arith.andi %27, %29 : i1
    %c16_i32_10 = arith.constant 16 : i32
    %31 = arith.cmpi slt, %26, %c16_i32_10 : i32
    %32 = arith.andi %30, %31 : i1
    %33 = arith.extui %32 : i1 to i32
    %c0_i32_11 = arith.constant 0 : i32
    %34 = arith.cmpi ne, %33, %c0_i32_11 : i32
    scf.if %34 {
      %35 = arith.subi %26, %4 : i32
      %36 = arith.index_cast %c2_i32 : i32 to index
      %c0_12 = arith.constant 0 : index
      %37 = vector.load %arg3[%36, %c0_12] : memref<3x128xf32, #tpu.memory_space<vmem>>, vector<1x128xf32>
      %38 = vector.shape_cast %37 : vector<1x128xf32> to vector<128xf32>
      %39 = vector.broadcast %cst_3 : f32 to vector<128xf32>
      %40 = arith.mulf %38, %39 : vector<128xf32>
      %41 = arith.index_cast %35 : i32 to index
      %c0_13 = arith.constant 0 : index
      %42 = vector.load %arg4[%41, %c0_13] : memref<8x128xf32, #tpu.memory_space<vmem>>, vector<1x128xf32>
      %43 = vector.shape_cast %42 : vector<1x128xf32> to vector<128xf32>
      %44 = vector.shape_cast %40 : vector<128xf32> to vector<1x128xf32>
      tpu.vector_store %arg4[%41, %c0_13], %44 {strides = array<i32>} : memref<8x128xf32, #tpu.memory_space<vmem>>, vector<1x128xf32>,
    } else {
    }
    %c3_i32 = arith.constant 3 : i32
    return
  }
  func.func @transform_0(%arg0: i32, %arg1: memref<3xi32, #tpu.memory_space<smem>>) -> (i32, i32) {
    %c0_i32 = arith.constant 0 : i32
    %c0_i32_0 = arith.constant 0 : i32
    return %arg0, %c0_i32 : i32, i32
  }
  func.func @transform_1(%arg0: i32, %arg1: memref<3xi32, #tpu.memory_space<smem>>) -> (i32, i32) {
    %c0_i32 = arith.constant 0 : i32
    %c0_i32_0 = arith.constant 0 : i32
    %c0_i32_1 = arith.constant 0 : i32
    return %c0_i32, %c0_i32_0 : i32, i32
  }
  func.func @transform_2(%arg0: i32, %arg1: memref<3xi32, #tpu.memory_space<smem>>) -> (i32, i32) {
    %c0_i32 = arith.constant 0 : i32
    %c0_i32_0 = arith.constant 0 : i32
    return %arg0, %c0_i32 : i32, i32
  }
}

</mosaic_0001>

<llo_original>
// kernel: tpu_custom_call.1
$region0: #{tpu_custom_call.1}
  #allocation0 [shape = 'u32[]', space=smem, size = 0x4, offset = 0x4, fixed_abs, tag = 'smem constant byte address 0x4 - core index']
  #allocation1 [shape = 'u32[144,128]{1,0:T(1,128)}', space=vmem, size = 0x12000, scoped, tag = 'internal scratch']
  #allocation2 [shape = 's32[1]{0}', space=sflag, size = 0x4, scoped, tag = 'scoped memory for tpu_custom_call.1']
  #allocation3 [shape = 'u8[512]{0}', space=smem, size = 0x200, scoped, tag = 'prefetched SMEM operand 0']
  %s0 = inlined_call_operand.vmem [shape: s32[3], index: 0, kind: input, shape index: {}]
  %s1 = inlined_call_operand.hbm [shape: f32[16,128], index: 1, kind: input, shape index: {}, may-alias: {1,3}]
  %s2 = inlined_call_operand.vmem [shape: f32[3,128], index: 2, kind: input, shape index: {}]
  %s3 = inlined_call_operand.hbm [shape: f32[16,128], index: 3, kind: output, shape index: {}, may-alias: {1,3}]
  %s4 = sld [smem:[#allocation0]]
  $region57: #{tpu_custom_call.1} parent=0
    _
  %s6 = ssub.s32 1, %s4
  %s7 = scalar_select 0, %s6, %s4
  %s8 = sshll.u32 %s0, 4
  %s9 = int_to_ptr.vmem [resolvable:$true] %s8
  %11 = dma.vmem_to_smem %s9, 16, [#allocation3], [#allocation2]
  %12 = dma.done [#allocation2], 16
  %13 = sfence
  $region1: #{tpu_custom_call.1} parent=0
    #allocation4 [shape = 'u8[8192]{0}', space=vmem, size = 0x2000, scoped, tag = 'input window, operand 1']
    #allocation5 [shape = 's32[2]{0}', space=sflag, size = 0x8, scoped, tag = 'scoped memory for tpu_custom_call.1']
    #allocation6 [shape = 's32[2]{0}', space=sflag, size = 0x8, scoped, tag = 'scoped memory for tpu_custom_call.1']
    #allocation7 [shape = 'u8[8192]{0}', space=vmem, size = 0x2000, scoped, tag = 'output window, operand 0']
    %14 = vsyncpa [#allocation5], 0
    %s15 = scalar_lea.sflag [#allocation5], 1
    %16 = vsyncpa %s15, 0
    %17 = vsyncpa [#allocation6], 0
    %s18 = scalar_lea.sflag [#allocation6], 1
    %19 = vsyncpa %s18, 0
    loop: start=0, step=1, limit=4
    $region2: #{tpu_custom_call.1} parent=1 // loop_pre_header
      _
    $region3: #{tpu_custom_call.1} parent=1 // loop_header
      %s21 = sphi 0, %s25
      %p22 = scmp.ge.s32.totalorder %s21, 4
      %s31 = sphi 0, %s33
      %s34 = sphi 0, %s31
      %s35 = sphi 0, %s34
      %s51 = sphi 0, %s35
      %s55 = sphi 0, %s55
      %s57 = sphi 0, %s55
      %s58 = sphi 0, %s57
      %s72 = sphi 0, %s58
      %s78 = sphi 0, %s80
      %s81 = sphi 0, %s78
      %s82 = sphi 0, %s81
      %s98 = sphi 0, %s82
    $region4: #{tpu_custom_call.1} parent=1 // loop_header_branch
      %24 = sbr.rel (%p22) target = $region8
    $region5: #{tpu_custom_call.1} parent=1 // loop_body
      %s26 = ssub.s32 %s21, 1
      %s27 = ssub.s32 %s21, 2
      %s28 = sadd.s32 %s21, 1
      %s29 = ssub.s32 %s21, %s28
      %p30 = scmp.eq.s32.totalorder %s29, 0
      %s32 = sadd.s32 %s31, 1
      %s33 = scalar_select %p30, %s31, %s32
      %p36 = pneg %p30
      %p37 = scmp.eq.s32.totalorder %s21, 1
      %p38 = por %p36, %p37
      %p39 = scmp.ne.s32.totalorder %s31, %s34
      %p40 = scmp.eq.s32.totalorder %s21, 0
      %p41 = por %p39, %p40
      %p42 = scmp.ne.s32.totalorder %s31, %s34
      %p43 = scmp.eq.s32.totalorder %s26, 1
      %p44 = por %p42, %p43
      %p45 = scmp.ne.s32.totalorder %s34, %s35
      %p46 = scmp.eq.s32.totalorder %s26, 0
      %p47 = por %p45, %p46
      %p48 = scmp.ne.s32.totalorder %s34, %s35
      %p49 = scmp.eq.s32.totalorder %s27, 1
      %p50 = por %p48, %p49
      %p52 = scmp.ne.s32.totalorder %s35, %s51
      %p53 = scmp.eq.s32.totalorder %s27, 0
      %p54 = por %p52, %p53
      %s56 = sadd.s32 %s55, 1
      %p59 = scmp.eq.s32.totalorder %s21, 1
      %p60 = scmp.ne.s32.totalorder %s55, %s57
      %p61 = scmp.eq.s32.totalorder %s21, 0
      %p62 = por %p60, %p61
      %p63 = scmp.ne.s32.totalorder %s55, %s57
      %p64 = scmp.eq.s32.totalorder %s26, 1
      %p65 = por %p63, %p64
      %p66 = scmp.ne.s32.totalorder %s57, %s58
      %p67 = scmp.eq.s32.totalorder %s26, 0
      %p68 = por %p66, %p67
      %p69 = scmp.ne.s32.totalorder %s57, %s58
      %p70 = scmp.eq.s32.totalorder %s27, 1
      %p71 = por %p69, %p70
      %p73 = scmp.ne.s32.totalorder %s58, %s72
      %p74 = scmp.eq.s32.totalorder %s27, 0
      %p75 = por %p73, %p74
      %s76 = ssub.s32 %s21, %s28
      %p77 = scmp.eq.s32.totalorder %s76, 0
      %s79 = sadd.s32 %s78, 1
      %s80 = scalar_select %p77, %s78, %s79
      %p83 = pneg %p77
      %p84 = scmp.eq.s32.totalorder %s21, 1
      %p85 = por %p83, %p84
      %p86 = scmp.ne.s32.totalorder %s78, %s81
      %p87 = scmp.eq.s32.totalorder %s21, 0
      %p88 = por %p86, %p87
      %p89 = scmp.ne.s32.totalorder %s78, %s81
      %p90 = scmp.eq.s32.totalorder %s26, 1
      %p91 = por %p89, %p90
      %p92 = scmp.ne.s32.totalorder %s81, %s82
      %p93 = scmp.eq.s32.totalorder %s26, 0
      %p94 = por %p92, %p93
      %p95 = scmp.ne.s32.totalorder %s81, %s82
      %p96 = scmp.eq.s32.totalorder %s27, 1
      %p97 = por %p95, %p96
      %p99 = scmp.ne.s32.totalorder %s82, %s98
      %p100 = scmp.eq.s32.totalorder %s27, 0
      %p101 = por %p99, %p100
      %p102 = scmp.le.s32.totalorder 1, %s21
      %p103 = scmp.lt.s32.totalorder %s21, 3
      %p104 = pnand %p102, %p103
      %p105 = pneg %p104
      // Predicated region
      $region9: #{tpu_custom_call.1} parent=5 // pred_check
        _
      $region10: #{tpu_custom_call.1} parent=5 // pred_check_branch
        %107 = sbr.rel (%p104) target = $region12
      $region11: #{tpu_custom_call.1} parent=5 // pred_region
        %s108 = ssub.s32 %s21, 1
        // Predicated region
        $region13: #{tpu_custom_call.1} parent=11 // pred_check
          %p109 = pneg %p68
        $region14: #{tpu_custom_call.1} parent=11 // pred_check_branch
          %111 = sbr.rel (%p109) target = $region16
        $region15: #{tpu_custom_call.1} parent=11 // pred_region
          _
        $region16: #{tpu_custom_call.1} parent=11 // pred_fallthru
          _
      $region12: #{tpu_custom_call.1} parent=5 // pred_fallthru
        _
      %p112 = scmp.lt.s32.totalorder %s21, 2
      // Predicated region
      $region17: #{tpu_custom_call.1} parent=5 // pred_check
        %p113 = pneg %p112
      $region18: #{tpu_custom_call.1} parent=5 // pred_check_branch
        %115 = sbr.rel (%p113) target = $region20
      $region19: #{tpu_custom_call.1} parent=5 // pred_region
        // Predicated region
        $region21: #{tpu_custom_call.1} parent=19 // pred_check
          %p116 = pneg %p41
        $region22: #{tpu_custom_call.1} parent=19 // pred_check_branch
          %118 = sbr.rel (%p116) target = $region24
        $region23: #{tpu_custom_call.1} parent=19 // pred_region
          %s119 = sand.u32 %s31, 1
          %s120 = scalar_lea.sflag [#allocation5], %s119
          %s121 = sand.u32 %s31, 1
          %s122 = smul.addr %s121, 8
          %s123 = scalar_lea.vmem [#allocation4], %s122
          %s125 = ssub.s32 128, 128
          %126 = vsyncadd %s120, %s125
          %s127 = smul.addr %s21, 128
          %s128 = scalar_lea.hbm %s1, %s127
          %s130 = sshll.u32 %s123, 4
          %s131 = int_to_ptr.vmem [resolvable:$true] %s130
          %133 = dma.hbm_to_vmem [thread:$0]  %s128, 128, %s131, %s120
        $region24: #{tpu_custom_call.1} parent=19 // pred_fallthru
          _
      $region20: #{tpu_custom_call.1} parent=5 // pred_fallthru
        _
      %p134 = scmp.le.s32.totalorder 1, %s21
      %p135 = scmp.lt.s32.totalorder %s21, 3
      %p136 = pnand %p134, %p135
      %p137 = pneg %p136
      // Predicated region
      $region25: #{tpu_custom_call.1} parent=5 // pred_check
        _
      $region26: #{tpu_custom_call.1} parent=5 // pred_check_branch
        %139 = sbr.rel (%p136) target = $region28
      $region27: #{tpu_custom_call.1} parent=5 // pred_region
        %s140 = ssub.s32 %s21, 1
        %s141 = sand.u32 %s34, 1
        %s142 = scalar_lea.sflag [#allocation5], %s141
        %s143 = sand.u32 %s34, 1
        %s144 = smul.addr %s143, 8
        %s145 = scalar_lea.vmem [#allocation4], %s144
        // Predicated region
        $region29: #{tpu_custom_call.1} parent=27 // pred_check
          %p146 = pneg %p47
        $region30: #{tpu_custom_call.1} parent=27 // pred_check_branch
          %148 = sbr.rel (%p146) target = $region32
        $region31: #{tpu_custom_call.1} parent=27 // pred_region
          %149 = dma.done %s142, 128
        $region32: #{tpu_custom_call.1} parent=27 // pred_fallthru
          _
        %s150 = sand.u32 %s34, 1
        %s151 = scalar_lea.sflag [#allocation5], %s150
        %s152 = sand.u32 %s34, 1
        %s153 = smul.addr %s152, 8
        %s154 = scalar_lea.vmem [#allocation4], %s153
        %p155 = pneg %p47
        %p156 = pneg %p44
        %p157 = pneg %p68
        %p158 = pneg %p65
        %p159 = pneg %p94
        %p160 = pneg %p91
        %s161 = sand.u32 %s81, 1
        %s162 = scalar_lea.sflag [#allocation6], %s161
        %s163 = sand.u32 %s81, 1
        %s164 = smul.addr %s163, 8
        %s165 = scalar_lea.vmem [#allocation7], %s164
        %v166 = vld [vmem:[%s145] sm:$0xff]
        %v167 = vmul.f32 %v166, 2.0
        %168 = vst [vmem:[%s165] sm:$0xff] %v167
        %s169 = smul.u32 %s26, 8
        %s170 = sld [smem:[#allocation3]]
        %p171 = scmp.ge.s32.totalorder %s170, %s169
        %s172 = sadd.s32 %s169, 8
        %p173 = scmp.lt.s32.totalorder %s170, %s172
        %p174 = pnand %p171, %p173
        %p175 = pneg %p174
        %p176 = scmp.lt.s32.totalorder %s170, 16
        %p177 = pnand %p175, %p176
        %p178 = pneg %p177
        // Predicated region
        $region33: #{tpu_custom_call.1} parent=27 // pred_check
          _
        $region34: #{tpu_custom_call.1} parent=27 // pred_check_branch
          %180 = sbr.rel (%p177) target = $region36
        $region35: #{tpu_custom_call.1} parent=27 // pred_region
          %s181 = ssub.s32 %s170, %s169
          %v182 = vld [vmem:[%s2] sm:$0x1]
          %v183 = vmul.f32 %v182, 2.0
          %s184 = scalar_lea.vmem %s165, %s181 [#allocation7]
          %185 = vst [vmem:[%s184] sm:$0x1] %v183
        $region36: #{tpu_custom_call.1} parent=27 // pred_fallthru
          _
        %s186 = sld [smem:[#allocation3 + $0x1]]
        %p187 = scmp.ge.s32.totalorder %s186, %s169
        %p188 = scmp.lt.s32.totalorder %s186, %s172
        %p189 = pnand %p187, %p188
        %p190 = pneg %p189
        %p191 = scmp.lt.s32.totalorder %s186, 16
        %p192 = pnand %p190, %p191
        %p193 = pneg %p192
        // Predicated region
        $region37: #{tpu_custom_call.1} parent=27 // pred_check
          _
        $region38: #{tpu_custom_call.1} parent=27 // pred_check_branch
          %195 = sbr.rel (%p192) target = $region40
        $region39: #{tpu_custom_call.1} parent=27 // pred_region
          %s196 = ssub.s32 %s186, %s169
          %v197 = vld [vmem:[%s2 + $0x1] sm:$0x1]
          %v198 = vmul.f32 %v197, 2.0
          %s199 = scalar_lea.vmem %s165, %s196 [#allocation7]
          %200 = vst [vmem:[%s199] sm:$0x1] %v198
        $region40: #{tpu_custom_call.1} parent=27 // pred_fallthru
          _
        %s201 = sld [smem:[#allocation3 + $0x2]]
        %p202 = scmp.ge.s32.totalorder %s201, %s169
        %p203 = scmp.lt.s32.totalorder %s201, %s172
        %p204 = pnand %p202, %p203
        %p205 = pneg %p204
        %p206 = scmp.lt.s32.totalorder %s201, 16
        %p207 = pnand %p205, %p206
        %p208 = pneg %p207
        // Predicated region
        $region41: #{tpu_custom_call.1} parent=27 // pred_check
          _
        $region42: #{tpu_custom_call.1} parent=27 // pred_check_branch
          %210 = sbr.rel (%p207) target = $region44
        $region43: #{tpu_custom_call.1} parent=27 // pred_region
          %s211 = ssub.s32 %s201, %s169
          %v212 = vld [vmem:[%s2 + $0x2] sm:$0x1]
          %v213 = vmul.f32 %v212, 2.0
          %s214 = scalar_lea.vmem %s165, %s211 [#allocation7]
          %215 = vst [vmem:[%s214] sm:$0x1] %v213
        $region44: #{tpu_custom_call.1} parent=27 // pred_fallthru
          _
        %s216 = sand.u32 %s81, 1
        %s217 = scalar_lea.sflag [#allocation6], %s216
        %s218 = sand.u32 %s81, 1
        %s219 = smul.addr %s218, 8
        %s220 = scalar_lea.vmem [#allocation7], %s219
        // Predicated region
        $region45: #{tpu_custom_call.1} parent=27 // pred_check
          %p221 = pneg %p91
        $region46: #{tpu_custom_call.1} parent=27 // pred_check_branch
          %223 = sbr.rel (%p221) target = $region48
        $region47: #{tpu_custom_call.1} parent=27 // pred_region
          %s225 = ssub.s32 128, 128
          %226 = vsyncadd %s217, %s225
          %s227 = smul.addr %s26, 128
          %s228 = scalar_lea.hbm %s3, %s227
          %s230 = sshll.u32 %s220, 4
          %s231 = int_to_ptr.vmem [resolvable:$true] %s230
          %233 = dma.vmem_to_hbm [thread:$0]  %s231, 128, %s228, %s217
        $region48: #{tpu_custom_call.1} parent=27 // pred_fallthru
          _
      $region28: #{tpu_custom_call.1} parent=5 // pred_fallthru
        _
      %p234 = scmp.le.s32.totalorder 2, %s21
      // Predicated region
      $region49: #{tpu_custom_call.1} parent=5 // pred_check
        %p235 = pneg %p234
      $region50: #{tpu_custom_call.1} parent=5 // pred_check_branch
        %237 = sbr.rel (%p235) target = $region52
      $region51: #{tpu_custom_call.1} parent=5 // pred_region
        %s238 = ssub.s32 %s21, 2
        // Predicated region
        $region53: #{tpu_custom_call.1} parent=51 // pred_check
          %p239 = pneg %p97
        $region54: #{tpu_custom_call.1} parent=51 // pred_check_branch
          %241 = sbr.rel (%p239) target = $region56
        $region55: #{tpu_custom_call.1} parent=51 // pred_region
          %s242 = sand.u32 %s82, 1
          %s243 = scalar_lea.sflag [#allocation6], %s242
          %s244 = sand.u32 %s82, 1
          %s245 = smul.addr %s244, 8
          %s246 = scalar_lea.vmem [#allocation7], %s245
          %247 = dma.done %s243, 128
        $region56: #{tpu_custom_call.1} parent=51 // pred_fallthru
          _
      $region52: #{tpu_custom_call.1} parent=5 // pred_fallthru
        _
    $region6: #{tpu_custom_call.1} parent=1 // loop_footer
      %s25 = sadd.s32 1, %s21
    $region7: #{tpu_custom_call.1} parent=1 // loop_footer_branch
      %20 = sbr.rel target = $region3
    $region8: #{tpu_custom_call.1} parent=1 // loop_exit
      _
    %248 = vsyncpa [#allocation5], 1
    %s249 = scalar_lea.sflag [#allocation5], 1
    %250 = vsyncpa %s249, 1
    %251 = vsyncpa [#allocation6], 1
    %s252 = scalar_lea.sflag [#allocation6], 1
    %253 = vsyncpa %s252, 1

</llo_original>
